<compile_context>
chip_gen: v7x
topology: tpu7x:2x2x1
jax: 0.10.0
libtpu: 0.0.40
codegen_flags: <defaults>
</compile_context>

<pallas_src>
import jax
import jax.numpy as jnp
from jax.experimental import pallas as pl
from jax.experimental.pallas import tpu as pltpu


IN_SIZE = 28 * 28   # 784 — encoder forward hardcodes 28*28
H_SIZE = 32
Z_SIZE = 8
OUT_PAD = ((IN_SIZE + 127) // 128) * 128   # 896, lane-dense recon width


def _round_up(n, m):
    return ((n + m - 1) // m) * m


def vae_kernel(
    x_ref, eps_ref,
    ew1_ref, eb1_ref, ew23_ref, eb23_ref,
    dw1_ref, db1_ref, dw2_ref, db2_ref,
    recon_ref, stats_ref,
):
    x = x_ref[...]            # (TB, 784) bf16
    eps = eps_ref[...]        # (TB, Z)   f32

    # ---- Encoder ----
    # h = relu(x @ W1 + b1)   (bf16 x bf16 -> f32 accumulate on the MXU)
    h = jnp.dot(x, ew1_ref[...], preferred_element_type=jnp.float32) + eb1_ref[...]
    h = jnp.maximum(h, 0.0)

    # Fused mu / log_sigma projection: one (32, 16) matmul instead of two (32, 8).
    stats = jnp.dot(h, ew23_ref[...], preferred_element_type=jnp.float32) + eb23_ref[...]
    stats_ref[...] = stats                       # packed [mu | log_sigma] output
    mu = stats[:, :Z_SIZE]
    log_sigma = stats[:, Z_SIZE:]

    # ---- Reparameterization:  z = mu + exp(log_sigma / 2) * eps ----
    z = mu + jnp.exp(log_sigma * 0.5) * eps

    # ---- Decoder ----
    hd = jnp.dot(z, dw1_ref[...], preferred_element_type=jnp.float32) + db1_ref[...]
    hd = jnp.maximum(hd, 0.0)

    logits = jnp.dot(
        hd.astype(jnp.bfloat16), dw2_ref[...], preferred_element_type=jnp.float32
    ) + db2_ref[...]
    # sigmoid = 1 / (1 + exp(-x)); exp + approx reciprocal both run on the EUP.
    recon_ref[...] = pl.reciprocal(1.0 + jnp.exp(-logits), approx=True)


def vae_forward(x, eps, params, *, tb=512):
    """x: (B, 784) f32, eps: (B, Z) f32, params: dict of f32 weights/biases.

    Returns (recon, mu, log_sigma) in f32, shapes (B, 784), (B, Z), (B, Z).
    """
    B = x.shape[0]

    # Batch tile: multiple of 16 (bf16 sublane packing), capped at `tb`.
    tb = min(tb, _round_up(max(B, 1), 16))
    B_pad = _round_up(B, tb)
    if B_pad != B:
        x = jnp.pad(x, ((0, B_pad - B), (0, 0)))
        eps = jnp.pad(eps, ((0, B_pad - B), (0, 0)))

    # Pack / cast parameters once, outside the kernel.
    x_bf16 = x.astype(jnp.bfloat16)
    ew1 = params["ew1"].astype(jnp.bfloat16)                          # (784, 32) bf16
    eb1 = params["eb1"]                                               # (1, 32)   f32
    ew23 = jnp.concatenate([params["ew2"], params["ew3"]], axis=1)    # (32, 16)  f32
    eb23 = jnp.concatenate([params["eb2"], params["eb3"]], axis=1)    # (1, 16)   f32
    dw1 = params["dw1"]                                               # (8, 32)   f32
    db1 = params["db1"]                                               # (1, 32)   f32
    dw2 = jnp.pad(params["dw2"], ((0, 0), (0, OUT_PAD - IN_SIZE))
                  ).astype(jnp.bfloat16)                              # (32, 896) bf16
    db2 = jnp.pad(params["db2"], ((0, 0), (0, OUT_PAD - IN_SIZE)))    # (1, 896)  f32

    grid = (B_pad // tb,)

    def tile_spec(feat):
        # Batch-tiled operand: block row i, full feature width.
        return pl.BlockSpec((tb, feat), lambda i: (i, 0))

    def resident_spec(shape):
        # Full-array block, same index every step -> stays resident in VMEM.
        nd = len(shape)
        return pl.BlockSpec(shape, lambda i, _nd=nd: (0,) * _nd)

    in_specs = [
        tile_spec(IN_SIZE),          # x
        tile_spec(Z_SIZE),           # eps
        resident_spec(ew1.shape),
        resident_spec(eb1.shape),
        resident_spec(ew23.shape),
        resident_spec(eb23.shape),
        resident_spec(dw1.shape),
        resident_spec(db1.shape),
        resident_spec(dw2.shape),
        resident_spec(db2.shape),
    ]
    out_specs = [
        tile_spec(OUT_PAD),          # recon (lane-dense, padded to 896)
        tile_spec(2 * Z_SIZE),       # packed [mu | log_sigma]
    ]
    out_shapes = (
        jax.ShapeDtypeStruct((B_pad, OUT_PAD), jnp.float32),
        jax.ShapeDtypeStruct((B_pad, 2 * Z_SIZE), jnp.float32),
    )

    recon_p, stats_p = pl.pallas_call(
        vae_kernel,
        out_shape=out_shapes,
        grid_spec=pl.GridSpec(grid=grid, in_specs=in_specs, out_specs=out_specs),
        compiler_params=pltpu.CompilerParams(
            dimension_semantics=("parallel",),      # megacore sharding on v7x
            vmem_limit_bytes=32 * 1024 * 1024,      # safe on v5e/v6e/v7x for TB<=512
        ),
    )(x_bf16, eps, ew1, eb1, ew23, eb23, dw1, db1, dw2, db2)

    recon = recon_p[:B, :IN_SIZE]
    mu = stats_p[:B, :Z_SIZE]
    log_sigma = stats_p[:B, Z_SIZE:]
    return recon, mu, log_sigma


def init_params(key):
    """Deterministic parameter init (shapes from the PyTorch module __init__)."""
    keys = jax.random.split(key, 10)

    def linear(kw, kb, fan_in, fan_out):
        # Uniform(-1/sqrt(fan_in), 1/sqrt(fan_in)) like torch.nn.Linear default.
        bound = 1.0 / jnp.sqrt(jnp.float32(fan_in))
        w = jax.random.uniform(kw, (fan_in, fan_out), jnp.float32, -bound, bound)
        b = jax.random.uniform(kb, (1, fan_out), jnp.float32, -bound, bound)
        return w, b

    ew1, eb1 = linear(keys[0], keys[1], IN_SIZE, H_SIZE)   # encoder.fc1
    ew2, eb2 = linear(keys[2], keys[3], H_SIZE, Z_SIZE)    # encoder.fc2 (mu)
    ew3, eb3 = linear(keys[4], keys[5], H_SIZE, Z_SIZE)    # encoder.fc3 (log_sigma)
    dw1, db1 = linear(keys[6], keys[7], Z_SIZE, H_SIZE)    # decoder.fc1
    dw2, db2 = linear(keys[8], keys[9], H_SIZE, IN_SIZE)   # decoder.fc2

    return dict(
        ew1=ew1, eb1=eb1, ew2=ew2, eb2=eb2, ew3=ew3, eb3=eb3,
        dw1=dw1, db1=db1, dw2=dw2, db2=db2,
    )


def vae_reference_f32(x, eps, p):
    """Pure-f32 JAX reference of the PyTorch forward."""
    h = jax.nn.relu(x @ p["ew1"] + p["eb1"])
    mu = h @ p["ew2"] + p["eb2"]
    log_sigma = h @ p["ew3"] + p["eb3"]
    z = mu + jnp.exp(log_sigma / 2.0) * eps
    hd = jax.nn.relu(z @ p["dw1"] + p["db1"])
    recon = jax.nn.sigmoid(hd @ p["dw2"] + p["db2"])
    return recon, mu, log_sigma


def vae_reference_mixed(x, eps, p):
    """Reference mirroring the kernel's bf16-input / f32-accumulate matmuls."""
    xb = x.astype(jnp.bfloat16)
    w1b = p["ew1"].astype(jnp.bfloat16)
    h = jax.nn.relu(
        jnp.dot(xb, w1b, preferred_element_type=jnp.float32) + p["eb1"])
    mu = h @ p["ew2"] + p["eb2"]
    log_sigma = h @ p["ew3"] + p["eb3"]
    z = mu + jnp.exp(log_sigma / 2.0) * eps
    hd = jax.nn.relu(z @ p["dw1"] + p["db1"])
    w2b = p["dw2"].astype(jnp.bfloat16)
    recon = jax.nn.sigmoid(
        jnp.dot(hd.astype(jnp.bfloat16), w2b, preferred_element_type=jnp.float32)
        + p["db2"])
    return recon, mu, log_sigma


if __name__ == "__main__":
    key = jax.random.PRNGKey(0)
    k_x, k_eps, k_params = jax.random.split(key, 3)

    B = 2
    # Input mimics a batch of flattened MNIST images in [0, 1).
    x = jax.random.uniform(k_x, (B, IN_SIZE), jnp.float32)
    # eps corresponds to torch.randn in sample_z (made deterministic here).
    eps = jax.random.normal(k_eps, (B, Z_SIZE), jnp.float32)

    params = init_params(k_params)

    recon, mu, log_sigma = vae_forward(x, eps, params)
    jax.block_until_ready((recon, mu, log_sigma))

    # Tight check against a precision-matched (bf16-input matmul) reference.
    r_m, mu_m, ls_m = vae_reference_mixed(x, eps, params)
    assert jnp.allclose(mu, mu_m, atol=1e-3, rtol=1e-3)
    assert jnp.allclose(log_sigma, ls_m, atol=1e-3, rtol=1e-3)
    assert jnp.allclose(recon, r_m, atol=1e-2, rtol=1e-2)

    # Looser sanity check against the pure-f32 reference (bf16 weight/input cast
    # and approx reciprocal are the only differences).
    r_f, mu_f, ls_f = vae_reference_f32(x, eps, params)
    assert jnp.allclose(mu, mu_f, atol=5e-2, rtol=5e-2)
    assert jnp.allclose(log_sigma, ls_f, atol=5e-2, rtol=5e-2)
    assert jnp.allclose(recon, r_f, atol=5e-2, rtol=5e-2)

    print("KERNEL_OK")
</pallas_src>

<mosaic_0001>
module attributes {stable_mosaic.version = 11 : i64} {
  func.func @vae_kernel(%arg0: i32, %arg1: memref<16x784xbf16, #tpu.memory_space<vmem>>, %arg2: memref<16x8xf32, #tpu.memory_space<vmem>>, %arg3: memref<784x32xbf16, #tpu.memory_space<vmem>>, %arg4: memref<1x32xf32, #tpu.memory_space<vmem>>, %arg5: memref<32x16xf32, #tpu.memory_space<vmem>>, %arg6: memref<1x16xf32, #tpu.memory_space<vmem>>, %arg7: memref<8x32xf32, #tpu.memory_space<vmem>>, %arg8: memref<1x32xf32, #tpu.memory_space<vmem>>, %arg9: memref<32x896xbf16, #tpu.memory_space<vmem>>, %arg10: memref<1x896xf32, #tpu.memory_space<vmem>>, %arg11: memref<16x896xf32, #tpu.memory_space<vmem>>, %arg12: memref<16x16xf32, #tpu.memory_space<vmem>>) attributes {dimension_semantics = [#tpu.dimension_semantics<parallel>], iteration_bounds = array<i64: 1>, scalar_prefetch = 0 : i64, scratch_operands = 0 : i64, tpu.core_type = #tpu.core_type<tc>, window_params = [{transform_indices = @transform_0, window_bounds = array<i64: 16, 784>}, {transform_indices = @transform_1, window_bounds = array<i64: 16, 8>}, {pipeline_mode = #tpu.pipeline_mode<synchronous>, transform_indices = @transform_2, window_bounds = array<i64: 784, 32>}, {pipeline_mode = #tpu.pipeline_mode<synchronous>, transform_indices = @transform_3, window_bounds = array<i64: 1, 32>}, {pipeline_mode = #tpu.pipeline_mode<synchronous>, transform_indices = @transform_4, window_bounds = array<i64: 32, 16>}, {pipeline_mode = #tpu.pipeline_mode<synchronous>, transform_indices = @transform_5, window_bounds = array<i64: 1, 16>}, {pipeline_mode = #tpu.pipeline_mode<synchronous>, transform_indices = @transform_6, window_bounds = array<i64: 8, 32>}, {pipeline_mode = #tpu.pipeline_mode<synchronous>, transform_indices = @transform_7, window_bounds = array<i64: 1, 32>}, {pipeline_mode = #tpu.pipeline_mode<synchronous>, transform_indices = @transform_8, window_bounds = array<i64: 32, 896>}, {pipeline_mode = #tpu.pipeline_mode<synchronous>, transform_indices = @transform_9, window_bounds = array<i64: 1, 896>}, {transform_indices = @transform_10, window_bounds = array<i64: 16, 896>}, {transform_indices = @transform_11, window_bounds = array<i64: 16, 16>}]} {
    %c0 = arith.constant 0 : index
    %c0_0 = arith.constant 0 : index
    %0 = vector.load %arg1[%c0, %c0_0] : memref<16x784xbf16, #tpu.memory_space<vmem>>, vector<16x784xbf16>
    %c0_1 = arith.constant 0 : index
    %c0_2 = arith.constant 0 : index
    %1 = vector.load %arg2[%c0_1, %c0_2] : memref<16x8xf32, #tpu.memory_space<vmem>>, vector<16x8xf32>
    %c0_3 = arith.constant 0 : index
    %c0_4 = arith.constant 0 : index
    %2 = vector.load %arg3[%c0_3, %c0_4] : memref<784x32xbf16, #tpu.memory_space<vmem>>, vector<784x32xbf16>
    %cst = arith.constant dense<0.000000e+00> : vector<16x32xf32>
    %3 = tpu.matmul %0, %2, %cst {dimension_numbers = #tpu.dot_dimension_numbers<[1], [0], [0], [1], [0, 0, 1, 1], [], []>} : vector<16x784xbf16>, vector<784x32xbf16>, vector<16x32xf32> -> vector<16x32xf32>
    %c0_5 = arith.constant 0 : index
    %c0_6 = arith.constant 0 : index
    %4 = vector.load %arg4[%c0_5, %c0_6] : memref<1x32xf32, #tpu.memory_space<vmem>>, vector<1x32xf32>
    %5 = vector.broadcast %4 : vector<1x32xf32> to vector<16x32xf32>
    %6 = arith.addf %3, %5 : vector<16x32xf32>
    %cst_7 = arith.constant 0.000000e+00 : f32
    %7 = vector.broadcast %cst_7 : f32 to vector<16x32xf32>
    %8 = arith.maximumf %6, %7 : vector<16x32xf32>
    %c0_8 = arith.constant 0 : index
    %c0_9 = arith.constant 0 : index
    %9 = vector.load %arg5[%c0_8, %c0_9] : memref<32x16xf32, #tpu.memory_space<vmem>>, vector<32x16xf32>
    %cst_10 = arith.constant dense<0.000000e+00> : vector<16x16xf32>
    %10 = tpu.matmul %8, %9, %cst_10 {dimension_numbers = #tpu.dot_dimension_numbers<[1], [0], [0], [1], [0, 0, 1, 1], [], []>} : vector<16x32xf32>, vector<32x16xf32>, vector<16x16xf32> -> vector<16x16xf32>
    %c0_11 = arith.constant 0 : index
    %c0_12 = arith.constant 0 : index
    %11 = vector.load %arg6[%c0_11, %c0_12] : memref<1x16xf32, #tpu.memory_space<vmem>>, vector<1x16xf32>
    %12 = vector.broadcast %11 : vector<1x16xf32> to vector<16x16xf32>
    %13 = arith.addf %10, %12 : vector<16x16xf32>
    %c0_13 = arith.constant 0 : index
    %c0_14 = arith.constant 0 : index
    %14 = vector.load %arg12[%c0_13, %c0_14] : memref<16x16xf32, #tpu.memory_space<vmem>>, vector<16x16xf32>
    tpu.vector_store %arg12[%c0_13, %c0_14], %13 {strides = array<i32>} : memref<16x16xf32, #tpu.memory_space<vmem>>, vector<16x16xf32>,
    %15 = vector.extract_strided_slice %13 {offsets = [0, 0], sizes = [16, 8], strides = [1, 1]} : vector<16x16xf32> to vector<16x8xf32>
    %16 = vector.extract_strided_slice %13 {offsets = [0, 8], sizes = [16, 8], strides = [1, 1]} : vector<16x16xf32> to vector<16x8xf32>
    %cst_15 = arith.constant 5.000000e-01 : f32
    %17 = vector.broadcast %cst_15 : f32 to vector<16x8xf32>
    %18 = arith.mulf %16, %17 : vector<16x8xf32>
    %19 = math.exp %18 : vector<16x8xf32>
    %20 = arith.mulf %19, %1 : vector<16x8xf32>
    %21 = arith.addf %15, %20 : vector<16x8xf32>
    %c0_16 = arith.constant 0 : index
    %c0_17 = arith.constant 0 : index
    %22 = vector.load %arg7[%c0_16, %c0_17] : memref<8x32xf32, #tpu.memory_space<vmem>>, vector<8x32xf32>
    %cst_18 = arith.constant dense<0.000000e+00> : vector<16x32xf32>
    %23 = tpu.matmul %21, %22, %cst_18 {dimension_numbers = #tpu.dot_dimension_numbers<[1], [0], [0], [1], [0, 0, 1, 1], [], []>} : vector<16x8xf32>, vector<8x32xf32>, vector<16x32xf32> -> vector<16x32xf32>
    %c0_19 = arith.constant 0 : index
    %c0_20 = arith.constant 0 : index
    %24 = vector.load %arg8[%c0_19, %c0_20] : memref<1x32xf32, #tpu.memory_space<vmem>>, vector<1x32xf32>
    %25 = vector.broadcast %24 : vector<1x32xf32> to vector<16x32xf32>
    %26 = arith.addf %23, %25 : vector<16x32xf32>
    %cst_21 = arith.constant 0.000000e+00 : f32
    %27 = vector.broadcast %cst_21 : f32 to vector<16x32xf32>
    %28 = arith.maximumf %26, %27 : vector<16x32xf32>
    %29 = arith.truncf %28 : vector<16x32xf32> to vector<16x32xbf16>
    %c0_22 = arith.constant 0 : index
    %c0_23 = arith.constant 0 : index
    %30 = vector.load %arg9[%c0_22, %c0_23] : memref<32x896xbf16, #tpu.memory_space<vmem>>, vector<32x896xbf16>
    %cst_24 = arith.constant dense<0.000000e+00> : vector<16x896xf32>
    %31 = tpu.matmul %29, %30, %cst_24 {dimension_numbers = #tpu.dot_dimension_numbers<[1], [0], [0], [1], [0, 0, 1, 1], [], []>} : vector<16x32xbf16>, vector<32x896xbf16>, vector<16x896xf32> -> vector<16x896xf32>
    %c0_25 = arith.constant 0 : index
    %c0_26 = arith.constant 0 : index
    %32 = vector.load %arg10[%c0_25, %c0_26] : memref<1x896xf32, #tpu.memory_space<vmem>>, vector<1x896xf32>
    %33 = vector.broadcast %32 : vector<1x896xf32> to vector<16x896xf32>
    %34 = arith.addf %31, %33 : vector<16x896xf32>
    %cst_27 = arith.constant 0.000000e+00 : f32
    %35 = vector.broadcast %cst_27 : f32 to vector<16x896xf32>
    %36 = arith.subf %35, %34 : vector<16x896xf32>
    %37 = math.exp %36 : vector<16x896xf32>
    %cst_28 = arith.constant 1.000000e+00 : f32
    %38 = vector.broadcast %cst_28 : f32 to vector<16x896xf32>
    %39 = arith.addf %38, %37 : vector<16x896xf32>
    %40 = tpu.reciprocal %39 {approx = true} : vector<16x896xf32> -> vector<16x896xf32>
    %c0_29 = arith.constant 0 : index
    %c0_30 = arith.constant 0 : index
    %41 = vector.load %arg11[%c0_29, %c0_30] : memref<16x896xf32, #tpu.memory_space<vmem>>, vector<16x896xf32>
    tpu.vector_store %arg11[%c0_29, %c0_30], %40 {strides = array<i32>} : memref<16x896xf32, #tpu.memory_space<vmem>>, vector<16x896xf32>,
    return
  }
  func.func @transform_0(%arg0: i32) -> (i32, i32) {
    %c0_i32 = arith.constant 0 : i32
    %c0_i32_0 = arith.constant 0 : i32
    return %arg0, %c0_i32 : i32, i32
  }
  func.func @transform_1(%arg0: i32) -> (i32, i32) {
    %c0_i32 = arith.constant 0 : i32
    %c0_i32_0 = arith.constant 0 : i32
    return %arg0, %c0_i32 : i32, i32
  }
  func.func @transform_2(%arg0: i32) -> (i32, i32) {
    %c0_i32 = arith.constant 0 : i32
    %c0_i32_0 = arith.constant 0 : i32
    %c0_i32_1 = arith.constant 0 : i32
    return %c0_i32, %c0_i32_0 : i32, i32
  }
  func.func @transform_3(%arg0: i32) -> (i32, i32) {
    %c0_i32 = arith.constant 0 : i32
    %c0_i32_0 = arith.constant 0 : i32
    %c0_i32_1 = arith.constant 0 : i32
    return %c0_i32, %c0_i32_0 : i32, i32
  }
  func.func @transform_4(%arg0: i32) -> (i32, i32) {
    %c0_i32 = arith.constant 0 : i32
    %c0_i32_0 = arith.constant 0 : i32
    %c0_i32_1 = arith.constant 0 : i32
    return %c0_i32, %c0_i32_0 : i32, i32
  }
  func.func @transform_5(%arg0: i32) -> (i32, i32) {
    %c0_i32 = arith.constant 0 : i32
    %c0_i32_0 = arith.constant 0 : i32
    %c0_i32_1 = arith.constant 0 : i32
    return %c0_i32, %c0_i32_0 : i32, i32
  }
  func.func @transform_6(%arg0: i32) -> (i32, i32) {
    %c0_i32 = arith.constant 0 : i32
    %c0_i32_0 = arith.constant 0 : i32
    %c0_i32_1 = arith.constant 0 : i32
    return %c0_i32, %c0_i32_0 : i32, i32
  }
  func.func @transform_7(%arg0: i32) -> (i32, i32) {
    %c0_i32 = arith.constant 0 : i32
    %c0_i32_0 = arith.constant 0 : i32
    %c0_i32_1 = arith.constant 0 : i32
    return %c0_i32, %c0_i32_0 : i32, i32
  }
  func.func @transform_8(%arg0: i32) -> (i32, i32) {
    %c0_i32 = arith.constant 0 : i32
    %c0_i32_0 = arith.constant 0 : i32
    %c0_i32_1 = arith.constant 0 : i32
    return %c0_i32, %c0_i32_0 : i32, i32
  }
  func.func @transform_9(%arg0: i32) -> (i32, i32) {
    %c0_i32 = arith.constant 0 : i32
    %c0_i32_0 = arith.constant 0 : i32
    %c0_i32_1 = arith.constant 0 : i32
    return %c0_i32, %c0_i32_0 : i32, i32
  }
  func.func @transform_10(%arg0: i32) -> (i32, i32) {
    %c0_i32 = arith.constant 0 : i32
    %c0_i32_0 = arith.constant 0 : i32
    return %arg0, %c0_i32 : i32, i32
  }
  func.func @transform_11(%arg0: i32) -> (i32, i32) {
    %c0_i32 = arith.constant 0 : i32
    %c0_i32_0 = arith.constant 0 : i32
    return %arg0, %c0_i32 : i32, i32
  }
}

</mosaic_0001>

<llo_original>
// kernel: tpu_custom_call.1
$region0: #{tpu_custom_call.1}
  #allocation0 [shape = 'u32[]', space=smem, size = 0x4, offset = 0x4, fixed_abs, tag = 'smem constant byte address 0x4 - core index']
  #allocation1 [shape = 'u32[144,128]{1,0:T(1,128)}', space=vmem, size = 0x12000, scoped, tag = 'internal scratch']
  %s0 = inlined_call_operand.vmem [shape: bf16[16,784], index: 0, kind: input, shape index: {}]
  %s1 = inlined_call_operand.vmem [shape: f32[16,8], index: 1, kind: input, shape index: {}]
  %s2 = inlined_call_operand.vmem [shape: bf16[784,32], index: 2, kind: input, shape index: {}]
  %s3 = inlined_call_operand.vmem [shape: f32[1,32], index: 3, kind: input, shape index: {}]
  %s4 = inlined_call_operand.vmem [shape: f32[32,16], index: 4, kind: input, shape index: {}]
  %s5 = inlined_call_operand.vmem [shape: f32[1,16], index: 5, kind: input, shape index: {}]
  %s6 = inlined_call_operand.vmem [shape: f32[8,32], index: 6, kind: input, shape index: {}]
  %s7 = inlined_call_operand.vmem [shape: f32[1,32], index: 7, kind: input, shape index: {}]
  %s8 = inlined_call_operand.vmem [shape: bf16[32,896], index: 8, kind: input, shape index: {}]
  %s9 = inlined_call_operand.vmem [shape: f32[1,896], index: 9, kind: input, shape index: {}]
  %s10 = inlined_call_operand.hbm [shape: f32[16,896], index: 10, kind: output, shape index: {0}]
  %s11 = inlined_call_operand.hbm [shape: f32[16,16], index: 11, kind: output, shape index: {1}]
  %12 = xla_tuple %s10, %s11
  %s13 = sld [smem:[#allocation0]]
  $region58: #{tpu_custom_call.1} parent=0
    _
  %s15 = ssub.s32 1, %s13
  %s16 = scalar_select 0, %s15, %s13
  $region1: #{tpu_custom_call.1} parent=0
    #allocation2 [shape = 'u8[57344]{0}', space=vmem, size = 0xe000, scoped, tag = 'output window, operand 0, single buffered']
    #allocation3 [shape = 's32[1]{0}', space=sflag, size = 0x4, scoped, tag = 'scoped memory for tpu_custom_call.1']
    #allocation4 [shape = 'u8[8192]{0}', space=vmem, size = 0x2000, scoped, tag = 'output window, operand 1, single buffered']
    #allocation5 [shape = 's32[1]{0}', space=sflag, size = 0x4, scoped, tag = 'scoped memory for tpu_custom_call.1']
    %17 = vsyncpa [#allocation3], 0
    %18 = vsyncpa [#allocation5], 0
    // Predicated region
    $region2: #{tpu_custom_call.1} parent=1 // pred_check
      _
    $region3: #{tpu_custom_call.1} parent=1 // pred_check_branch
      %20 = sbr.rel (0) target = $region5
    $region4: #{tpu_custom_call.1} parent=1 // pred_region
      _
    $region5: #{tpu_custom_call.1} parent=1 // pred_fallthru
      _
    // Predicated region
    $region6: #{tpu_custom_call.1} parent=1 // pred_check
      _
    $region7: #{tpu_custom_call.1} parent=1 // pred_check_branch
      %22 = sbr.rel (0) target = $region9
    $region8: #{tpu_custom_call.1} parent=1 // pred_region
      _
    $region9: #{tpu_custom_call.1} parent=1 // pred_fallthru
      _
    // Predicated region
    $region10: #{tpu_custom_call.1} parent=1 // pred_check
      _
    $region11: #{tpu_custom_call.1} parent=1 // pred_check_branch
      %24 = sbr.rel (0) target = $region13
    $region12: #{tpu_custom_call.1} parent=1 // pred_region
      _
    $region13: #{tpu_custom_call.1} parent=1 // pred_fallthru
      _
    // Predicated region
    $region14: #{tpu_custom_call.1} parent=1 // pred_check
      _
    $region15: #{tpu_custom_call.1} parent=1 // pred_check_branch
      %26 = sbr.rel (0) target = $region17
    $region16: #{tpu_custom_call.1} parent=1 // pred_region
      _
    $region17: #{tpu_custom_call.1} parent=1 // pred_fallthru
      _
    // Predicated region
    $region18: #{tpu_custom_call.1} parent=1 // pred_check
      _
    $region19: #{tpu_custom_call.1} parent=1 // pred_check_branch
      %28 = sbr.rel (0) target = $region21
    $region20: #{tpu_custom_call.1} parent=1 // pred_region
      _
    $region21: #{tpu_custom_call.1} parent=1 // pred_fallthru
      _
    // Predicated region
    $region22: #{tpu_custom_call.1} parent=1 // pred_check
      _
    $region23: #{tpu_custom_call.1} parent=1 // pred_check_branch
      %30 = sbr.rel (0) target = $region25
    $region24: #{tpu_custom_call.1} parent=1 // pred_region
      _
    $region25: #{tpu_custom_call.1} parent=1 // pred_fallthru
      _
    // Predicated region
    $region26: #{tpu_custom_call.1} parent=1 // pred_check
      _
    $region27: #{tpu_custom_call.1} parent=1 // pred_check_branch
      %32 = sbr.rel (0) target = $region29
    $region28: #{tpu_custom_call.1} parent=1 // pred_region
      _
    $region29: #{tpu_custom_call.1} parent=1 // pred_fallthru
      _
    // Predicated region
    $region30: #{tpu_custom_call.1} parent=1 // pred_check
      _
    $region31: #{tpu_custom_call.1} parent=1 // pred_check_branch
      %34 = sbr.rel (0) target = $region33
    $region32: #{tpu_custom_call.1} parent=1 // pred_region
      _
    $region33: #{tpu_custom_call.1} parent=1 // pred_fallthru
      _
    // Predicated region
    $region34: #{tpu_custom_call.1} parent=1 // pred_check
      _
    $region35: #{tpu_custom_call.1} parent=1 // pred_check_branch
      %36 = sbr.rel (0) target = $region37
    $region36: #{tpu_custom_call.1} parent=1 // pred_region
      _
    $region37: #{tpu_custom_call.1} parent=1 // pred_fallthru
      _
    // Predicated region
    $region38: #{tpu_custom_call.1} parent=1 // pred_check
      _
    $region39: #{tpu_custom_call.1} parent=1 // pred_check_branch
      %38 = sbr.rel (0) target = $region41
    $region40: #{tpu_custom_call.1} parent=1 // pred_region
      _
    $region41: #{tpu_custom_call.1} parent=1 // pred_fallthru
      _
    %v40 = vld [vmem:[%s0] sm:$0xff]
    %v41 = vld [vmem:[%s0 + $0x8] sm:$0xff]
    %v42 = vld [vmem:[%s0 + $0x10] sm:$0xff]
    %v43 = vld [vmem:[%s0 + $0x18] sm:$0xf]
    %v44 = vld [vmem:[%s0 + $0x1c] sm:$0xff]
    %v45 = vld [vmem:[%s0 + $0x24] sm:$0xff]
    %v46 = vld [vmem:[%s0 + $0x2c] sm:$0xff]
    %v47 = vld [vmem:[%s0 + $0x34] sm:$0xf]
    %v48 = vld [vmem:[%s1] sm:$0xff]
    %v49 = vld [vmem:[%s1 + $0x8] sm:$0xff]
    %v50 = vld [vmem:[%s2] sm:$0xf]
    %v51 = vld [vmem:[%s2 + $0x4] sm:$0xf]
    %v52 = vld [vmem:[%s2 + $0x8] sm:$0xf]
    %v53 = vld [vmem:[%s2 + $0xc] sm:$0xf]
    %v54 = vld [vmem:[%s2 + $0x10] sm:$0xf]
    %v55 = vld [vmem:[%s2 + $0x14] sm:$0xf]
    %v56 = vld [vmem:[%s2 + $0x18] sm:$0xf]
    %v57 = vld [vmem:[%s2 + $0x1c] sm:$0xf]
    %v58 = vld [vmem:[%s2 + $0x20] sm:$0xf]
    %v59 = vld [vmem:[%s2 + $0x24] sm:$0xf]
    %v60 = vld [vmem:[%s2 + $0x28] sm:$0xf]
    %v61 = vld [vmem:[%s2 + $0x2c] sm:$0xf]
    %v62 = vld [vmem:[%s2 + $0x30] sm:$0xf]
    %v63 = vld [vmem:[%s2 + $0x34] sm:$0xf]
    %v64 = vld [vmem:[%s2 + $0x38] sm:$0xf]
    %v65 = vld [vmem:[%s2 + $0x3c] sm:$0xf]
    %v66 = vld [vmem:[%s2 + $0x40] sm:$0xf]
    %v67 = vld [vmem:[%s2 + $0x44] sm:$0xf]
    %v68 = vld [vmem:[%s2 + $0x48] sm:$0xf]
    %v69 = vld [vmem:[%s2 + $0x4c] sm:$0xf]
    %v70 = vld [vmem:[%s2 + $0x50] sm:$0xf]
    %v71 = vld [vmem:[%s2 + $0x54] sm:$0xf]
    %v72 = vld [vmem:[%s2 + $0x58] sm:$0xf]
    %v73 = vld [vmem:[%s2 + $0x5c] sm:$0xf]
    %v74 = vld [vmem:[%s2 + $0x60] sm:$0xf]
    %v75 = vld [vmem:[%s2 + $0x64] sm:$0xf]
    %v76 = vld [vmem:[%s2 + $0x68] sm:$0xf]
    %v77 = vld [vmem:[%s2 + $0x6c] sm:$0xf]
    %v78 = vld [vmem:[%s2 + $0x70] sm:$0xf]
    %v79 = vld [vmem:[%s2 + $0x74] sm:$0xf]
    %v80 = vld [vmem:[%s2 + $0x78] sm:$0xf]
    %v81 = vld [vmem:[%s2 + $0x7c] sm:$0xf]
    %v82 = vld [vmem:[%s2 + $0x80] sm:$0xf]
    %v83 = vld [vmem:[%s2 + $0x84] sm:$0xf]
    %v84 = vld [vmem:[%s2 + $0x88] sm:$0xf]
    %v85 = vld [vmem:[%s2 + $0x8c] sm:$0xf]
    %v86 = vld [vmem:[%s2 + $0x90] sm:$0xf]
    %v87 = vld [vmem:[%s2 + $0x94] sm:$0xf]
    %v88 = vld [vmem:[%s2 + $0x98] sm:$0xf]
    %v89 = vld [vmem:[%s2 + $0x9c] sm:$0xf]
    %v90 = vld [vmem:[%s2 + $0xa0] sm:$0xf]
    %v91 = vld [vmem:[%s2 + $0xa4] sm:$0xf]
    %v92 = vld [vmem:[%s2 + $0xa8] sm:$0xf]
    %v93 = vld [vmem:[%s2 + $0xac] sm:$0xf]
    %v94 = vld [vmem:[%s2 + $0xb0] sm:$0xf]
    %v95 = vld [vmem:[%s2 + $0xb4] sm:$0xf]
    %v96 = vld [vmem:[%s2 + $0xb8] sm:$0xf]
    %v97 = vld [vmem:[%s2 + $0xbc] sm:$0xf]
    %v98 = vld [vmem:[%s2 + $0xc0] sm:$0xf]
    %v99 = vld [vmem:[%s2 + $0xc4] sm:$0xf]
    %v100 = vld [vmem:[%s2 + $0xc8] sm:$0xf]
    %v101 = vld [vmem:[%s2 + $0xcc] sm:$0xf]
    %v102 = vld [vmem:[%s2 + $0xd0] sm:$0xf]
    %v103 = vld [vmem:[%s2 + $0xd4] sm:$0xf]
    %v104 = vld [vmem:[%s2 + $0xd8] sm:$0xf]
    %v105 = vld [vmem:[%s2 + $0xdc] sm:$0xf]
    %v106 = vld [vmem:[%s2 + $0xe0] sm:$0xf]
    %v107 = vld [vmem:[%s2 + $0xe4] sm:$0xf]
    %v108 = vld [vmem:[%s2 + $0xe8] sm:$0xf]
    %v109 = vld [vmem:[%s2 + $0xec] sm:$0xf]
    %v110 = vld [vmem:[%s2 + $0xf0] sm:$0xf]
    %v111 = vld [vmem:[%s2 + $0xf4] sm:$0xf]
    %v112 = vld [vmem:[%s2 + $0xf8] sm:$0xf]
    %v113 = vld [vmem:[%s2 + $0xfc] sm:$0xf]
    %v114 = vld [vmem:[%s2 + $0x100] sm:$0xf]
    %v115 = vld [vmem:[%s2 + $0x104] sm:$0xf]
    %v116 = vld [vmem:[%s2 + $0x108] sm:$0xf]
    %v117 = vld [vmem:[%s2 + $0x10c] sm:$0xf]
    %v118 = vld [vmem:[%s2 + $0x110] sm:$0xf]
    %v119 = vld [vmem:[%s2 + $0x114] sm:$0xf]
    %v120 = vld [vmem:[%s2 + $0x118] sm:$0xf]
    %v121 = vld [vmem:[%s2 + $0x11c] sm:$0xf]
    %v122 = vld [vmem:[%s2 + $0x120] sm:$0xf]
    %v123 = vld [vmem:[%s2 + $0x124] sm:$0xf]
    %v124 = vld [vmem:[%s2 + $0x128] sm:$0xf]
    %v125 = vld [vmem:[%s2 + $0x12c] sm:$0xf]
    %v126 = vld [vmem:[%s2 + $0x130] sm:$0xf]
    %v127 = vld [vmem:[%s2 + $0x134] sm:$0xf]
    %v128 = vld [vmem:[%s2 + $0x138] sm:$0xf]
    %v129 = vld [vmem:[%s2 + $0x13c] sm:$0xf]
    %v130 = vld [vmem:[%s2 + $0x140] sm:$0xf]
    %v131 = vld [vmem:[%s2 + $0x144] sm:$0xf]
    %v132 = vld [vmem:[%s2 + $0x148] sm:$0xf]
    %v133 = vld [vmem:[%s2 + $0x14c] sm:$0xf]
    %v134 = vld [vmem:[%s2 + $0x150] sm:$0xf]
    %v135 = vld [vmem:[%s2 + $0x154] sm:$0xf]
    %v136 = vld [vmem:[%s2 + $0x158] sm:$0xf]
    %v137 = vld [vmem:[%s2 + $0x15c] sm:$0xf]
    %v138 = vld [vmem:[%s2 + $0x160] sm:$0xf]
    %v139 = vld [vmem:[%s2 + $0x164] sm:$0xf]
    %v140 = vld [vmem:[%s2 + $0x168] sm:$0xf]
    %v141 = vld [vmem:[%s2 + $0x16c] sm:$0xf]
    %v142 = vld [vmem:[%s2 + $0x170] sm:$0xf]
    %v143 = vld [vmem:[%s2 + $0x174] sm:$0xf]
    %v144 = vld [vmem:[%s2 + $0x178] sm:$0xf]
    %v145 = vld [vmem:[%s2 + $0x17c] sm:$0xf]
    %v146 = vld [vmem:[%s2 + $0x180] sm:$0xf]
    %v147 = vld [vmem:[%s2 + $0x184] sm:$0xf]
    %v148 = vld [vmem:[%s3] sm:$0x1]
    %v150 = vlaneseq
    %v151 = vshrl.u32 %v150, 7
    %v152 = vsub.s32 0, %v151
    %v153 = vrot.slane %v148, %v152
    %v163 = vunpack.c.l.b16 %v40
    %v164 = vunpack.c.h.b16 %v40
    %v165 = vunpack.c.l.b16 %v41
    %v166 = vunpack.c.h.b16 %v41
    %v167 = vunpack.c.l.b16 %v42
    %v168 = vunpack.c.h.b16 %v42
    %v169 = vunpack.c.l.b16 %v43
    %v170 = vunpack.c.l.b16 %v44
    %v171 = vunpack.c.h.b16 %v44
    %v172 = vunpack.c.l.b16 %v45
    %v173 = vunpack.c.h.b16 %v45
    %v174 = vunpack.c.l.b16 %v46
    %v175 = vunpack.c.h.b16 %v46
    %v176 = vunpack.c.l.b16 %v47
    %v177 = vpack.c.b16 %v170, %v163
    %v178 = vpack.c.b16 %v171, %v164
    %v179 = vpack.c.b16 %v172, %v165
    %v180 = vpack.c.b16 %v173, %v166
    %v181 = vpack.c.b16 %v174, %v167
    %v182 = vpack.c.b16 %v175, %v168
    %v183 = vpack.c.b16 %v176, %v169
    %v288 = vunpack.c.l.b16 %v50
    %v289 = vunpack.c.l.b16 %v51
    %v290 = vunpack.c.l.b16 %v52
    %v291 = vunpack.c.l.b16 %v53
    %v292 = vunpack.c.l.b16 %v54
    %v293 = vunpack.c.l.b16 %v55
    %v294 = vunpack.c.l.b16 %v56
    %v295 = vunpack.c.l.b16 %v57
    %v296 = vunpack.c.l.b16 %v58
    %v297 = vunpack.c.l.b16 %v59
    %v298 = vunpack.c.l.b16 %v60
    %v299 = vunpack.c.l.b16 %v61
    %v300 = vunpack.c.l.b16 %v62
    %v301 = vunpack.c.l.b16 %v63
    %v302 = vunpack.c.l.b16 %v64
    %v303 = vunpack.c.l.b16 %v65
    %v304 = vunpack.c.l.b16 %v66
    %v305 = vunpack.c.l.b16 %v67
    %v306 = vunpack.c.l.b16 %v68
    %v307 = vunpack.c.l.b16 %v69
    %v308 = vunpack.c.l.b16 %v70
    %v309 = vunpack.c.l.b16 %v71
    %v310 = vunpack.c.l.b16 %v72
    %v311 = vunpack.c.l.b16 %v73
    %v312 = vunpack.c.l.b16 %v74
    %v313 = vunpack.c.l.b16 %v75
    %v314 = vunpack.c.l.b16 %v76
    %v315 = vunpack.c.l.b16 %v77
    %v316 = vunpack.c.l.b16 %v78
    %v317 = vunpack.c.l.b16 %v79
    %v318 = vunpack.c.l.b16 %v80
    %v319 = vunpack.c.l.b16 %v81
    %v320 = vunpack.c.l.b16 %v82
    %v321 = vunpack.c.l.b16 %v83
    %v322 = vunpack.c.l.b16 %v84
    %v323 = vunpack.c.l.b16 %v85
    %v324 = vunpack.c.l.b16 %v86
    %v325 = vunpack.c.l.b16 %v87
    %v326 = vunpack.c.l.b16 %v88
    %v327 = vunpack.c.l.b16 %v89
    %v328 = vunpack.c.l.b16 %v90
    %v329 = vunpack.c.l.b16 %v91
    %v330 = vunpack.c.l.b16 %v92
    %v331 = vunpack.c.l.b16 %v93
    %v332 = vunpack.c.l.b16 %v94
    %v333 = vunpack.c.l.b16 %v95
    %v334 = vunpack.c.l.b16 %v96
    %v335 = vunpack.c.l.b16 %v97
    %v336 = vunpack.c.l.b16 %v98
    %v337 = vunpack.c.l.b16 %v99
    %v338 = vunpack.c.l.b16 %v100
    %v339 = vunpack.c.l.b16 %v101
    %v340 = vunpack.c.l.b16 %v102
    %v341 = vunpack.c.l.b16 %v103
    %v342 = vunpack.c.l.b16 %v104
    %v343 = vunpack.c.l.b16 %v105
    %v344 = vunpack.c.l.b16 %v106
    %v345 = vunpack.c.l.b16 %v107
    %v346 = vunpack.c.l.b16 %v108
    %v347 = vunpack.c.l.b16 %v109
    %v348 = vunpack.c.l.b16 %v110
    %v349 = vunpack.c.l.b16 %v111
    %v350 = vunpack.c.l.b16 %v112
    %v351 = vunpack.c.l.b16 %v113
    %v352 = vunpack.c.l.b16 %v114
    %v353 = vunpack.c.l.b16 %v115
    %v354 = vunpack.c.l.b16 %v116
    %v355 = vunpack.c.l.b16 %v117
    %v356 = vunpack.c.l.b16 %v118
    %v357 = vunpack.c.l.b16 %v119
    %v358 = vunpack.c.l.b16 %v120
    %v359 = vunpack.c.l.b16 %v121
    %v360 = vunpack.c.l.b16 %v122
    %v361 = vunpack.c.l.b16 %v123
    %v362 = vunpack.c.l.b16 %v124
    %v363 = vunpack.c.l.b16 %v125
    %v364 = vunpack.c.l.b16 %v126
    %v365 = vunpack.c.l.b16 %v127
    %v366 = vunpack.c.l.b16 %v128
    %v367 = vunpack.c.l.b16 %v129
    %v368 = vunpack.c.l.b16 %v130
    %v369 = vunpack.c.l.b16 %v131
    %v370 = vunpack.c.l.b16 %v132
    %v371 = vunpack.c.l.b16 %v133
    %v372 = vunpack.c.l.b16 %v134
    %v373 = vunpack.c.l.b16 %v135
    %v374 = vunpack.c.l.b16 %v136
    %v375 = vunpack.c.l.b16 %v137
    %v376 = vunpack.c.l.b16 %v138
    %v377 = vunpack.c.l.b16 %v139
    %v378 = vunpack.c.l.b16 %v140
    %v379 = vunpack.c.l.b16 %v141
    %v380 = vunpack.c.l.b16 %v142
    %v381 = vunpack.c.l.b16 %v143
    %v382 = vunpack.c.l.b16 %v144
    %v383 = vunpack.c.l.b16 %v145
    %v384 = vunpack.c.l.b16 %v146
    %v385 = vunpack.c.l.b16 %v147
    %v386 = vpack.c.b16 %v289, %v288
    %v387 = vpack.c.b16 %v291, %v290
    %v388 = vpack.c.b16 %v293, %v292
    %v389 = vpack.c.b16 %v295, %v294
    %v390 = vpack.c.b16 %v297, %v296
    %v391 = vpack.c.b16 %v299, %v298
    %v392 = vpack.c.b16 %v301, %v300
    %v393 = vpack.c.b16 %v303, %v302
    %v394 = vpack.c.b16 %v305, %v304
    %v395 = vpack.c.b16 %v307, %v306
    %v396 = vpack.c.b16 %v309, %v308
    %v397 = vpack.c.b16 %v311, %v310
    %v398 = vpack.c.b16 %v313, %v312
    %v399 = vpack.c.b16 %v315, %v314
    %v400 = vpack.c.b16 %v317, %v316
    %v401 = vpack.c.b16 %v319, %v318
    %v402 = vpack.c.b16 %v321, %v320
    %v403 = vpack.c.b16 %v323, %v322
    %v404 = vpack.c.b16 %v325, %v324
    %v405 = vpack.c.b16 %v327, %v326
    %v406 = vpack.c.b16 %v329, %v328
    %v407 = vpack.c.b16 %v331, %v330
    %v408 = vpack.c.b16 %v333, %v332
    %v409 = vpack.c.b16 %v335, %v334
    %v410 = vpack.c.b16 %v337, %v336
    %v411 = vpack.c.b16 %v339, %v338
    %v412 = vpack.c.b16 %v341, %v340
    %v413 = vpack.c.b16 %v343, %v342
    %v414 = vpack.c.b16 %v345, %v344
    %v415 = vpack.c.b16 %v347, %v346
    %v416 = vpack.c.b16 %v349, %v348
    %v417 = vpack.c.b16 %v351, %v350
    %v418 = vpack.c.b16 %v353, %v352
    %v419 = vpack.c.b16 %v355, %v354
    %v420 = vpack.c.b16 %v357, %v356
    %v421 = vpack.c.b16 %v359, %v358
    %v422 = vpack.c.b16 %v361, %v360
    %v423 = vpack.c.b16 %v363, %v362
    %v424 = vpack.c.b16 %v365, %v364
    %v425 = vpack.c.b16 %v367, %v366
    %v426 = vpack.c.b16 %v369, %v368
    %v427 = vpack.c.b16 %v371, %v370
    %v428 = vpack.c.b16 %v373, %v372
    %v429 = vpack.c.b16 %v375, %v374
    %v430 = vpack.c.b16 %v377, %v376
    %v431 = vpack.c.b16 %v379, %v378
    %v432 = vpack.c.b16 %v381, %v380
    %v433 = vpack.c.b16 %v383, %v382
    %v434 = vpack.c.b16 %v385, %v384
    %vm484 = vcmask 130048
    %v486 = vsel %vm484, %v183, 0
    %488 = vmatprep.subr.bf16.mxu0 0
    %489 = vmatpush1.bf16.msra.mxu0 %v386
    %490 = vmatprep.subr.bf16.mxu0 0
    %491 = vmatpush1.bf16.msra.mxu0 %v387
    %492 = vmatprep.subr.bf16.mxu0 0
    %493 = vmatpush1.bf16.msra.mxu0 %v388
    %494 = vmatprep.subr.bf16.mxu0 0
    %495 = vmatpush1.bf16.msra.mxu0 %v389
    %496 = vmatprep.subr.bf16.mxu0 0
    %497 = vmatpush1.bf16.msra.mxu0 %v390
    %498 = vmatprep.subr.bf16.mxu0 0
    %499 = vmatpush1.bf16.msra.mxu0 %v391
    %500 = vmatprep.subr.bf16.mxu0 0
    %501 = vmatpush1.bf16.msra.mxu0 %v392
    %502 = vmatprep.subr.bf16.mxu0 0
    %503 = vmatpush1.bf16.msra.mxu0 %v393
    %504 = vmatprep.subr.bf16.mxu0 0
    %505 = vmatpush1.bf16.msra.mxu0 %v394
    %506 = vmatprep.subr.bf16.mxu0 0
    %507 = vmatpush1.bf16.msra.mxu0 %v395
    %508 = vmatprep.subr.bf16.mxu0 0
    %509 = vmatpush1.bf16.msra.mxu0 %v396
    %510 = vmatprep.subr.bf16.mxu0 0
    %511 = vmatpush1.bf16.msra.mxu0 %v397
    %512 = vmatprep.subr.bf16.mxu0 0
    %513 = vmatpush1.bf16.msra.mxu0 %v398
    %514 = vmatprep.subr.bf16.mxu0 0
    %515 = vmatpush1.bf16.msra.mxu0 %v399
    %516 = vmatprep.subr.bf16.mxu0 0
    %517 = vmatpush1.bf16.msra.mxu0 %v400
    %518 = vmatprep.subr.bf16.mxu0 0
    %519 = vmatpush1.bf16.msra.mxu0 %v401
    %520 = vmatprep.mubr.bf16.mxu0 %v178
    %521 = vmatmul.mubr.bf16.gmra.mrb[0].mxu0 %v177
    %v522 = vpop.f32.mrb[0].mxu0
    %v523 = vadd.f32 %v153, %v522
    %v524 = vpop.f32.mrb[0].mxu0
    %v525 = vpop.f32.mrb[0].mxu0
    %v526 = vadd.f32 %v153, %v525
    %v527 = vpop.f32.mrb[0].mxu0
    %528 = vdwg.mxu0
    %529 = vmatprep.subr.bf16.mxu0 0
    %530 = vmatpush1.bf16.msra.mxu0 %v402
    %531 = vmatprep.subr.bf16.mxu0 0
    %532 = vmatpush1.bf16.msra.mxu0 %v403
    %533 = vmatprep.subr.bf16.mxu0 0
    %534 = vmatpush1.bf16.msra.mxu0 %v404
    %535 = vmatprep.subr.bf16.mxu0 0
    %536 = vmatpush1.bf16.msra.mxu0 %v405
    %537 = vmatprep.subr.bf16.mxu0 0
    %538 = vmatpush1.bf16.msra.mxu0 %v406
    %539 = vmatprep.subr.bf16.mxu0 0
    %540 = vmatpush1.bf16.msra.mxu0 %v407
    %541 = vmatprep.subr.bf16.mxu0 0
    %542 = vmatpush1.bf16.msra.mxu0 %v408
    %543 = vmatprep.subr.bf16.mxu0 0
    %544 = vmatpush1.bf16.msra.mxu0 %v409
    %545 = vmatprep.subr.bf16.mxu0 0
    %546 = vmatpush1.bf16.msra.mxu0 %v410
    %547 = vmatprep.subr.bf16.mxu0 0
    %548 = vmatpush1.bf16.msra.mxu0 %v411
    %549 = vmatprep.subr.bf16.mxu0 0
    %550 = vmatpush1.bf16.msra.mxu0 %v412
    %551 = vmatprep.subr.bf16.mxu0 0
    %552 = vmatpush1.bf16.msra.mxu0 %v413
    %553 = vmatprep.subr.bf16.mxu0 0
    %554 = vmatpush1.bf16.msra.mxu0 %v414
    %555 = vmatprep.subr.bf16.mxu0 0
    %556 = vmatpush1.bf16.msra.mxu0 %v415
    %557 = vmatprep.subr.bf16.mxu0 0
    %558 = vmatpush1.bf16.msra.mxu0 %v416
    %559 = vmatprep.subr.bf16.mxu0 0
    %560 = vmatpush1.bf16.msra.mxu0 %v417
    %561 = vmatprep.mubr.bf16.mxu0 %v180
    %562 = vmatmul.mubr.bf16.gmra.mrb[0].mxu0 %v179
    %v563 = vpop.f32.mrb[0].mxu0
    %v564 = vadd.f32 %v523, %v563
    %v565 = vpop.f32.mrb[0].mxu0
    %v566 = vpop.f32.mrb[0].mxu0
    %v567 = vadd.f32 %v526, %v566
    %v568 = vpop.f32.mrb[0].mxu0
    %569 = vdwg.mxu0
    %570 = vmatprep.subr.bf16.mxu0 0
    %571 = vmatpush1.bf16.msra.mxu0 %v418
    %572 = vmatprep.subr.bf16.mxu0 0
    %573 = vmatpush1.bf16.msra.mxu0 %v419
    %574 = vmatprep.subr.bf16.mxu0 0
    %575 = vmatpush1.bf16.msra.mxu0 %v420
    %576 = vmatprep.subr.bf16.mxu0 0
    %577 = vmatpush1.bf16.msra.mxu0 %v421
    %578 = vmatprep.subr.bf16.mxu0 0
    %579 = vmatpush1.bf16.msra.mxu0 %v422
    %580 = vmatprep.subr.bf16.mxu0 0
    %581 = vmatpush1.bf16.msra.mxu0 %v423
    %582 = vmatprep.subr.bf16.mxu0 0
    %583 = vmatpush1.bf16.msra.mxu0 %v424
    %584 = vmatprep.subr.bf16.mxu0 0
    %585 = vmatpush1.bf16.msra.mxu0 %v425
    %586 = vmatprep.subr.bf16.mxu0 0
    %587 = vmatpush1.bf16.msra.mxu0 %v426
    %588 = vmatprep.subr.bf16.mxu0 0
    %589 = vmatpush1.bf16.msra.mxu0 %v427
    %590 = vmatprep.subr.bf16.mxu0 0
    %591 = vmatpush1.bf16.msra.mxu0 %v428
    %592 = vmatprep.subr.bf16.mxu0 0
    %593 = vmatpush1.bf16.msra.mxu0 %v429
    %594 = vmatprep.subr.bf16.mxu0 0
    %595 = vmatpush1.bf16.msra.mxu0 %v430
    %596 = vmatprep.subr.bf16.mxu0 0
    %597 = vmatpush1.bf16.msra.mxu0 %v431
    %598 = vmatprep.subr.bf16.mxu0 0
    %599 = vmatpush1.bf16.msra.mxu0 %v432
    %600 = vmatprep.subr.bf16.mxu0 0
    %601 = vmatpush1.bf16.msra.mxu0 %v433
    %602 = vmatprep.mubr.bf16.mxu0 %v182
    %603 = vmatmul.mubr.bf16.gmra.mrb[0].mxu0 %v181
    %v604 = vpop.f32.mrb[0].mxu0
    %v605 = vadd.f32 %v564, %v604
    %v606 = vpop.f32.mrb[0].mxu0
    %v607 = vpop.f32.mrb[0].mxu0
    %v608 = vadd.f32 %v567, %v607
    %v609 = vpop.f32.mrb[0].mxu0
    %610 = vdwg.mxu0
    %611 = vmatprep.subr.bf16.mxu0 0
    %612 = vmatpush1.bf16.msra.mxu0 %v434
    %613 = vmatprep.subr.bf16.mxu0 0
    %614 = vmatpush1.bf16.msra.mxu0 0
    %615 = vmatprep.subr.bf16.mxu0 0
    %616 = vmatpush1.bf16.msra.mxu0 0
    %617 = vmatprep.subr.bf16.mxu0 0
    %618 = vmatpush1.bf16.msra.mxu0 0
    %619 = vmatprep.subr.bf16.mxu0 0
    %620 = vmatpush1.bf16.msra.mxu0 0
    %621 = vmatprep.subr.bf16.mxu0 0
    %622 = vmatpush1.bf16.msra.mxu0 0
    %623 = vmatprep.subr.bf16.mxu0 0
    %624 = vmatpush1.bf16.msra.mxu0 0
    %625 = vmatprep.subr.bf16.mxu0 0
    %626 = vmatpush1.bf16.msra.mxu0 0
    %627 = vmatprep.subr.bf16.mxu0 0
    %628 = vmatpush1.bf16.msra.mxu0 0
    %629 = vmatprep.subr.bf16.mxu0 0
    %630 = vmatpush1.bf16.msra.mxu0 0
    %631 = vmatprep.subr.bf16.mxu0 0
    %632 = vmatpush1.bf16.msra.mxu0 0
    %633 = vmatprep.subr.bf16.mxu0 0
    %634 = vmatpush1.bf16.msra.mxu0 0
    %635 = vmatprep.subr.bf16.mxu0 0
    %636 = vmatpush1.bf16.msra.mxu0 0
    %637 = vmatprep.subr.bf16.mxu0 0
    %638 = vmatpush1.bf16.msra.mxu0 0
    %639 = vmatprep.subr.bf16.mxu0 0
    %640 = vmatpush1.bf16.msra.mxu0 0
    %641 = vmatprep.subr.bf16.mxu0 0
    %642 = vmatpush1.bf16.msra.mxu0 0
    %643 = vmatprep.mubr.bf16.mxu0 0
    %644 = vmatmul.mubr.bf16.gmra.mrb[0].mxu0 %v486
    %v645 = vpop.f32.mrb[0].mxu0
    %v646 = vadd.f32 %v605, %v645
    %v647 = vpop.f32.mrb[0].mxu0
    %v648 = vpop.f32.mrb[0].mxu0
    %v649 = vadd.f32 %v608, %v648
    %v650 = vpop.f32.mrb[0].mxu0
    %651 = vdwg.mxu0
    %v652 = vmax.f32 %v646, 0.0
    %v653 = vmax.f32 %v649, 0.0
    %v654 = vld [vmem:[%s4] sm:$0xff]
    %v655 = vld [vmem:[%s4 + $0x8] sm:$0xff]
    %v656 = vld [vmem:[%s4 + $0x10] sm:$0xff]
    %v657 = vld [vmem:[%s4 + $0x18] sm:$0xff]
    %v658 = vld [vmem:[%s5] sm:$0x1]
    %v660 = vlaneseq
    %v661 = vshrl.u32 %v660, 7
    %v662 = vsub.s32 0, %v661
    %v663 = vrot.slane %v658, %v662
    %vm665 = vcmask 261120
    %v667 = vsel %vm665, %v652, 0
    %v670 = vsel %vm665, %v653, 0
    %672 = vmatprep.subr.mxu0 0.0
    %673 = vmatpush1.msra.mxu0 %v654
    %674 = vmatprep.subr.mxu0 0.0
    %675 = vmatpush1.msra.mxu0 %v655
    %676 = vmatprep.subr.mxu0 0.0
    %677 = vmatpush1.msra.mxu0 %v656
    %678 = vmatprep.subr.mxu0 0.0
    %679 = vmatpush1.msra.mxu0 %v657
    %680 = vmatprep.subr.mxu0 0.0
    %681 = vmatpush1.msra.mxu0 0.0
    %682 = vmatprep.subr.mxu0 0.0
    %683 = vmatpush1.msra.mxu0 0.0
    %684 = vmatprep.subr.mxu0 0.0
    %685 = vmatpush1.msra.mxu0 0.0
    %686 = vmatprep.subr.mxu0 0.0
    %687 = vmatpush1.msra.mxu0 0.0
    %688 = vmatprep.subr.mxu0 0.0
    %689 = vmatpush1.msra.mxu0 0.0
    %690 = vmatprep.subr.mxu0 0.0
    %691 = vmatpush1.msra.mxu0 0.0
    %692 = vmatprep.subr.mxu0 0.0
    %693 = vmatpush1.msra.mxu0 0.0
    %694 = vmatprep.subr.mxu0 0.0
    %695 = vmatpush1.msra.mxu0 0.0
    %696 = vmatprep.subr.mxu0 0.0
    %697 = vmatpush1.msra.mxu0 0.0
    %698 = vmatprep.subr.mxu0 0.0
    %699 = vmatpush1.msra.mxu0 0.0
    %700 = vmatprep.subr.mxu0 0.0
    %701 = vmatpush1.msra.mxu0 0.0
    %702 = vmatprep.subr.mxu0 0.0
    %703 = vmatpush1.msra.mxu0 0.0
    %704 = vmatprep.subr.mxu0 0.0
    %705 = vmatpush1.msra.mxu0 0.0
    %706 = vmatprep.subr.mxu0 0.0
    %707 = vmatpush1.msra.mxu0 0.0
    %708 = vmatprep.subr.mxu0 0.0
    %709 = vmatpush1.msra.mxu0 0.0
    %710 = vmatprep.subr.mxu0 0.0
    %711 = vmatpush1.msra.mxu0 0.0
    %712 = vmatprep.subr.mxu0 0.0
    %713 = vmatpush1.msra.mxu0 0.0
    %714 = vmatprep.subr.mxu0 0.0
    %715 = vmatpush1.msra.mxu0 0.0
    %716 = vmatprep.subr.mxu0 0.0
    %717 = vmatpush1.msra.mxu0 0.0
    %718 = vmatprep.subr.mxu0 0.0
    %719 = vmatpush1.msra.mxu0 0.0
    %720 = vmatprep.subr.mxu0 0.0
    %721 = vmatpush1.msra.mxu0 0.0
    %722 = vmatprep.subr.mxu0 0.0
    %723 = vmatpush1.msra.mxu0 0.0
    %724 = vmatprep.subr.mxu0 0.0
    %725 = vmatpush1.msra.mxu0 0.0
    %726 = vmatprep.subr.mxu0 0.0
    %727 = vmatpush1.msra.mxu0 0.0
    %728 = vmatprep.subr.mxu0 0.0
    %729 = vmatpush1.msra.mxu0 0.0
    %730 = vmatprep.subr.mxu0 0.0
    %731 = vmatpush1.msra.mxu0 0.0
    %732 = vmatprep.subr.mxu0 0.0
    %733 = vmatpush1.msra.mxu0 0.0
    %734 = vmatprep.subr.mxu0 0.0
    %735 = vmatpush1.msra.mxu0 0.0
    %736 = vmatprep.mubr.f32.mxu0 0.0
    %737 = vmatmul.mubr.f32.gmra.mrb[0].mxu0 %v667
    %v738 = vpop.f32.mrb[0].mxu0
    %v739 = vadd.f32 %v663, %v738
    %v740 = vpop.f32.mrb[0].mxu0
    %741 = vmatprep.mubr.f32.mxu0 0.0
    %742 = vmatmul.mubr.f32.gmra.mrb[0].mxu0 %v670
    %v743 = vpop.f32.mrb[0].mxu0
    %v744 = vadd.f32 %v663, %v743
    %v745 = vpop.f32.mrb[0].mxu0
    %746 = vdwg.mxu0
    %747 = vst.msk [vmem:[#allocation4] sm:$0xff] %vm484, %v739
    %748 = vst.msk [vmem:[#allocation4 + $0x8] sm:$0xff] %vm484, %v744
    %v749 = vmul.f32 %v739, 0.5
    %v750 = vmul.f32 %v744, 0.5
    %v751 = vmul.f32 %v749, 1.442695
    %v752 = vpow.pop %v751
    %v753 = vmul.f32 %v750, 1.442695
    %v754 = vpow.pop %v753
    %757 = vrot.lane.b32.xlu0 %v48, 8
    %v758 = vpop.permute.xlu0 %757
    %759 = vrot.lane.b32.xlu0 %v49, 8
    %v760 = vpop.permute.xlu0 %759
    %v763 = vmul.f32 %v752, %v758
    %v764 = vmul.f32 %v754, %v760
    %767 = vrot.lane.b32.xlu0 %v763, 120
    %v768 = vpop.permute.xlu0 %767
    %769 = vrot.lane.b32.xlu0 %v764, 120
    %v770 = vpop.permute.xlu0 %769
    %v773 = vadd.f32 %v739, %v768
    %v774 = vadd.f32 %v744, %v770
    %v775 = vld [vmem:[%s6] sm:$0xff]
    %v776 = vld [vmem:[%s7] sm:$0x1]
    %v778 = vlaneseq
    %v779 = vshrl.u32 %v778, 7
    %v780 = vsub.s32 0, %v779
    %v781 = vrot.slane %v776, %v780
    %vm783 = vcmask 64512
    %v785 = vsel %vm783, %v773, 0
    %v788 = vsel %vm783, %v774, 0
    %790 = vmatprep.subr.mxu0 0.0
    %791 = vmatpush1.msra.mxu0 %v775
    %792 = vmatprep.subr.mxu0 0.0
    %793 = vmatpush1.msra.mxu0 0.0
    %794 = vmatprep.subr.mxu0 0.0
    %795 = vmatpush1.msra.mxu0 0.0
    %796 = vmatprep.subr.mxu0 0.0
    %797 = vmatpush1.msra.mxu0 0.0
    %798 = vmatprep.subr.mxu0 0.0
    %799 = vmatpush1.msra.mxu0 0.0
    %800 = vmatprep.subr.mxu0 0.0
    %801 = vmatpush1.msra.mxu0 0.0
    %802 = vmatprep.subr.mxu0 0.0
    %803 = vmatpush1.msra.mxu0 0.0
    %804 = vmatprep.subr.mxu0 0.0
    %805 = vmatpush1.msra.mxu0 0.0
    %806 = vmatprep.subr.mxu0 0.0
    %807 = vmatpush1.msra.mxu0 0.0
    %808 = vmatprep.subr.mxu0 0.0
    %809 = vmatpush1.msra.mxu0 0.0
    %810 = vmatprep.subr.mxu0 0.0
    %811 = vmatpush1.msra.mxu0 0.0
    %812 = vmatprep.subr.mxu0 0.0
    %813 = vmatpush1.msra.mxu0 0.0
    %814 = vmatprep.subr.mxu0 0.0
    %815 = vmatpush1.msra.mxu0 0.0
    %816 = vmatprep.subr.mxu0 0.0
    %817 = vmatpush1.msra.mxu0 0.0
    %818 = vmatprep.subr.mxu0 0.0
    %819 = vmatpush1.msra.mxu0 0.0
    %820 = vmatprep.subr.mxu0 0.0
    %821 = vmatpush1.msra.mxu0 0.0
    %822 = vmatprep.subr.mxu0 0.0
    %823 = vmatpush1.msra.mxu0 0.0
    %824 = vmatprep.subr.mxu0 0.0
    %825 = vmatpush1.msra.mxu0 0.0
    %826 = vmatprep.subr.mxu0 0.0
    %827 = vmatpush1.msra.mxu0 0.0
    %828 = vmatprep.subr.mxu0 0.0
    %829 = vmatpush1.msra.mxu0 0.0
    %830 = vmatprep.subr.mxu0 0.0
    %831 = vmatpush1.msra.mxu0 0.0
    %832 = vmatprep.subr.mxu0 0.0
    %833 = vmatpush1.msra.mxu0 0.0
    %834 = vmatprep.subr.mxu0 0.0
    %835 = vmatpush1.msra.mxu0 0.0
    %836 = vmatprep.subr.mxu0 0.0
    %837 = vmatpush1.msra.mxu0 0.0
    %838 = vmatprep.subr.mxu0 0.0
    %839 = vmatpush1.msra.mxu0 0.0
    %840 = vmatprep.subr.mxu0 0.0
    %841 = vmatpush1.msra.mxu0 0.0
    %842 = vmatprep.subr.mxu0 0.0
    %843 = vmatpush1.msra.mxu0 0.0
    %844 = vmatprep.subr.mxu0 0.0
    %845 = vmatpush1.msra.mxu0 0.0
    %846 = vmatprep.subr.mxu0 0.0
    %847 = vmatpush1.msra.mxu0 0.0
    %848 = vmatprep.subr.mxu0 0.0
    %849 = vmatpush1.msra.mxu0 0.0
    %850 = vmatprep.subr.mxu0 0.0
    %851 = vmatpush1.msra.mxu0 0.0
    %852 = vmatprep.subr.mxu0 0.0
    %853 = vmatpush1.msra.mxu0 0.0
    %854 = vmatprep.mubr.f32.mxu0 0.0
    %855 = vmatmul.mubr.f32.gmra.mrb[0].mxu0 %v785
    %v856 = vpop.f32.mrb[0].mxu0
    %v857 = vadd.f32 %v781, %v856
    %v858 = vpop.f32.mrb[0].mxu0
    %859 = vmatprep.mubr.f32.mxu0 0.0
    %860 = vmatmul.mubr.f32.gmra.mrb[0].mxu0 %v788
    %v861 = vpop.f32.mrb[0].mxu0
    %v862 = vadd.f32 %v781, %v861
    %v863 = vpop.f32.mrb[0].mxu0
    %864 = vdwg.mxu0
    %v865 = vmax.f32 %v857, 0.0
    %v866 = vmax.f32 %v862, 0.0
    %v867 = vpack.c.bf16 %v866, %v865
    %v868 = vld [vmem:[%s8] sm:$0xff]
    %v869 = vld [vmem:[%s8 + $0x8] sm:$0xff]
    %v870 = vld [vmem:[%s8 + $0x10] sm:$0xff]
    %v871 = vld [vmem:[%s8 + $0x18] sm:$0xf]
    %v872 = vld [vmem:[%s8 + $0x1c] sm:$0xff]
    %v873 = vld [vmem:[%s8 + $0x24] sm:$0xff]
    %v874 = vld [vmem:[%s8 + $0x2c] sm:$0xff]
    %v875 = vld [vmem:[%s8 + $0x34] sm:$0xf]
    %v876 = vld [vmem:[%s8 + $0x38] sm:$0xff]
    %v877 = vld [vmem:[%s8 + $0x40] sm:$0xff]
    %v878 = vld [vmem:[%s8 + $0x48] sm:$0xff]
    %v879 = vld [vmem:[%s8 + $0x50] sm:$0xf]
    %v880 = vld [vmem:[%s8 + $0x54] sm:$0xff]
    %v881 = vld [vmem:[%s8 + $0x5c] sm:$0xff]
    %v882 = vld [vmem:[%s8 + $0x64] sm:$0xff]
    %v883 = vld [vmem:[%s8 + $0x6c] sm:$0xf]
    %v884 = vld [vmem:[%s9] sm:$0xff]
    %v886 = vlaneseq
    %v887 = vshrl.u32 %v886, 7
    %v888 = vsub.s32 0, %v887
    %v889 = vrot.slane %v884, %v888
    %v890 = vlaneseq
    %v891 = vshrl.u32 %v890, 7
    %v892 = vsub.s32 1, %v891
    %v893 = vrot.slane %v884, %v892
    %v894 = vlaneseq
    %v895 = vshrl.u32 %v894, 7
    %v896 = vsub.s32 2, %v895
    %v897 = vrot.slane %v884, %v896
    %v898 = vlaneseq
    %v899 = vshrl.u32 %v898, 7
    %v900 = vsub.s32 3, %v899
    %v901 = vrot.slane %v884, %v900
    %v902 = vlaneseq
    %v903 = vshrl.u32 %v902, 7
    %v904 = vsub.s32 4, %v903
    %v905 = vrot.slane %v884, %v904
    %v906 = vlaneseq
    %v907 = vshrl.u32 %v906, 7
    %v908 = vsub.s32 5, %v907
    %v909 = vrot.slane %v884, %v908
    %v910 = vlaneseq
    %v911 = vshrl.u32 %v910, 7
    %v912 = vsub.s32 6, %v911
    %v913 = vrot.slane %v884, %v912
    %v937 = vunpack.c.l.b16 %v868
    %v938 = vunpack.c.h.b16 %v868
    %v939 = vunpack.c.l.b16 %v869
    %v940 = vunpack.c.h.b16 %v869
    %v941 = vunpack.c.l.b16 %v870
    %v942 = vunpack.c.h.b16 %v870
    %v943 = vunpack.c.l.b16 %v871
    %v944 = vunpack.c.l.b16 %v872
    %v945 = vunpack.c.h.b16 %v872
    %v946 = vunpack.c.l.b16 %v873
    %v947 = vunpack.c.h.b16 %v873
    %v948 = vunpack.c.l.b16 %v874
    %v949 = vunpack.c.h.b16 %v874
    %v950 = vunpack.c.l.b16 %v875
    %v951 = vunpack.c.l.b16 %v876
    %v952 = vunpack.c.h.b16 %v876
    %v953 = vunpack.c.l.b16 %v877
    %v954 = vunpack.c.h.b16 %v877
    %v955 = vunpack.c.l.b16 %v878
    %v956 = vunpack.c.h.b16 %v878
    %v957 = vunpack.c.l.b16 %v879
    %v958 = vunpack.c.l.b16 %v880
    %v959 = vunpack.c.h.b16 %v880
    %v960 = vunpack.c.l.b16 %v881
    %v961 = vunpack.c.h.b16 %v881
    %v962 = vunpack.c.l.b16 %v882
    %v963 = vunpack.c.h.b16 %v882
    %v964 = vunpack.c.l.b16 %v883
    %v965 = vpack.c.b16 %v944, %v937
    %v966 = vpack.c.b16 %v945, %v938
    %v967 = vpack.c.b16 %v946, %v939
    %v968 = vpack.c.b16 %v947, %v940
    %v969 = vpack.c.b16 %v948, %v941
    %v970 = vpack.c.b16 %v949, %v942
    %v971 = vpack.c.b16 %v950, %v943
    %v972 = vpack.c.b16 %v958, %v951
    %v973 = vpack.c.b16 %v959, %v952
    %v974 = vpack.c.b16 %v960, %v953
    %v975 = vpack.c.b16 %v961, %v954
    %v976 = vpack.c.b16 %v962, %v955
    %v977 = vpack.c.b16 %v963, %v956
    %v978 = vpack.c.b16 %v964, %v957
    %v994 = vsel %vm665, %v867, 0
    %996 = vmatprep.subr.bf16.mxu0 %v966
    %997 = vmatpush1.bf16.msra.mxu0 %v965
    %998 = vmatprep.subr.bf16.mxu0 %v973
    %999 = vmatpush1.bf16.msra.mxu0 %v972
    %1000 = vmatprep.subr.bf16.mxu0 0
    %1001 = vmatpush1.bf16.msra.mxu0 0
    %1002 = vmatprep.subr.bf16.mxu0 0
    %1003 = vmatpush1.bf16.msra.mxu0 0
    %1004 = vmatprep.subr.bf16.mxu0 0
    %1005 = vmatpush1.bf16.msra.mxu0 0
    %1006 = vmatprep.subr.bf16.mxu0 0
    %1007 = vmatpush1.bf16.msra.mxu0 0
    %1008 = vmatprep.subr.bf16.mxu0 0
    %1009 = vmatpush1.bf16.msra.mxu0 0
    %1010 = vmatprep.subr.bf16.mxu0 0
    %1011 = vmatpush1.bf16.msra.mxu0 0
    %1012 = vmatprep.subr.bf16.mxu0 0
    %1013 = vmatpush1.bf16.msra.mxu0 0
    %1014 = vmatprep.subr.bf16.mxu0 0
    %1015 = vmatpush1.bf16.msra.mxu0 0
    %1016 = vmatprep.subr.bf16.mxu0 0
    %1017 = vmatpush1.bf16.msra.mxu0 0
    %1018 = vmatprep.subr.bf16.mxu0 0
    %1019 = vmatpush1.bf16.msra.mxu0 0
    %1020 = vmatprep.subr.bf16.mxu0 0
    %1021 = vmatpush1.bf16.msra.mxu0 0
    %1022 = vmatprep.subr.bf16.mxu0 0
    %1023 = vmatpush1.bf16.msra.mxu0 0
    %1024 = vmatprep.subr.bf16.mxu0 0
    %1025 = vmatpush1.bf16.msra.mxu0 0
    %1026 = vmatprep.subr.bf16.mxu0 0
    %1027 = vmatpush1.bf16.msra.mxu0 0
    %1028 = vmatprep.mubr.bf16.mxu0 0
    %1029 = vmatmul.mubr.bf16.gmra.mrb[0].mxu0 %v994
    %v1030 = vpop.f32.mrb[0].mxu0
    %v1031 = vadd.f32 %v889, %v1030
    %v1032 = vpop.f32.mrb[0].mxu0
    %v1033 = vadd.f32 %v893, %v1032
    %v1034 = vpop.f32.mrb[0].mxu0
    %v1035 = vadd.f32 %v889, %v1034
    %v1036 = vpop.f32.mrb[0].mxu0
    %v1037 = vadd.f32 %v893, %v1036
    %1038 = vdwg.mxu0
    %1039 = vmatprep.subr.bf16.mxu0 %v968
    %1040 = vmatpush1.bf16.msra.mxu0 %v967
    %1041 = vmatprep.subr.bf16.mxu0 %v975
    %1042 = vmatpush1.bf16.msra.mxu0 %v974
    %1043 = vmatprep.subr.bf16.mxu0 0
    %1044 = vmatpush1.bf16.msra.mxu0 0
    %1045 = vmatprep.subr.bf16.mxu0 0
    %1046 = vmatpush1.bf16.msra.mxu0 0
    %1047 = vmatprep.subr.bf16.mxu0 0
    %1048 = vmatpush1.bf16.msra.mxu0 0
    %1049 = vmatprep.subr.bf16.mxu0 0
    %1050 = vmatpush1.bf16.msra.mxu0 0
    %1051 = vmatprep.subr.bf16.mxu0 0
    %1052 = vmatpush1.bf16.msra.mxu0 0
    %1053 = vmatprep.subr.bf16.mxu0 0
    %1054 = vmatpush1.bf16.msra.mxu0 0
    %1055 = vmatprep.subr.bf16.mxu0 0
    %1056 = vmatpush1.bf16.msra.mxu0 0
    %1057 = vmatprep.subr.bf16.mxu0 0
    %1058 = vmatpush1.bf16.msra.mxu0 0
    %1059 = vmatprep.subr.bf16.mxu0 0
    %1060 = vmatpush1.bf16.msra.mxu0 0
    %1061 = vmatprep.subr.bf16.mxu0 0
    %1062 = vmatpush1.bf16.msra.mxu0 0
    %1063 = vmatprep.subr.bf16.mxu0 0
    %1064 = vmatpush1.bf16.msra.mxu0 0
    %1065 = vmatprep.subr.bf16.mxu0 0
    %1066 = vmatpush1.bf16.msra.mxu0 0
    %1067 = vmatprep.subr.bf16.mxu0 0
    %1068 = vmatpush1.bf16.msra.mxu0 0
    %1069 = vmatprep.subr.bf16.mxu0 0
    %1070 = vmatpush1.bf16.msra.mxu0 0
    %1071 = vmatprep.mubr.bf16.mxu0 0
    %1072 = vmatmul.mubr.bf16.gmra.mrb[0].mxu0 %v994
    %v1073 = vpop.f32.mrb[0].mxu0
    %v1074 = vadd.f32 %v897, %v1073
    %v1075 = vpop.f32.mrb[0].mxu0
    %v1076 = vadd.f32 %v901, %v1075
    %v1077 = vpop.f32.mrb[0].mxu0
    %v1078 = vadd.f32 %v897, %v1077
    %v1079 = vpop.f32.mrb[0].mxu0
    %v1080 = vadd.f32 %v901, %v1079
    %1081 = vdwg.mxu0
    %1082 = vmatprep.subr.bf16.mxu0 %v970
    %1083 = vmatpush1.bf16.msra.mxu0 %v969
    %1084 = vmatprep.subr.bf16.mxu0 %v977
    %1085 = vmatpush1.bf16.msra.mxu0 %v976
    %1086 = vmatprep.subr.bf16.mxu0 0
    %1087 = vmatpush1.bf16.msra.mxu0 0
    %1088 = vmatprep.subr.bf16.mxu0 0
    %1089 = vmatpush1.bf16.msra.mxu0 0
    %1090 = vmatprep.subr.bf16.mxu0 0
    %1091 = vmatpush1.bf16.msra.mxu0 0
    %1092 = vmatprep.subr.bf16.mxu0 0
    %1093 = vmatpush1.bf16.msra.mxu0 0
    %1094 = vmatprep.subr.bf16.mxu0 0
    %1095 = vmatpush1.bf16.msra.mxu0 0
    %1096 = vmatprep.subr.bf16.mxu0 0
    %1097 = vmatpush1.bf16.msra.mxu0 0
    %1098 = vmatprep.subr.bf16.mxu0 0
    %1099 = vmatpush1.bf16.msra.mxu0 0
    %1100 = vmatprep.subr.bf16.mxu0 0
    %1101 = vmatpush1.bf16.msra.mxu0 0
    %1102 = vmatprep.subr.bf16.mxu0 0
    %1103 = vmatpush1.bf16.msra.mxu0 0
    %1104 = vmatprep.subr.bf16.mxu0 0
    %1105 = vmatpush1.bf16.msra.mxu0 0
    %1106 = vmatprep.subr.bf16.mxu0 0
    %1107 = vmatpush1.bf16.msra.mxu0 0
    %1108 = vmatprep.subr.bf16.mxu0 0
    %1109 = vmatpush1.bf16.msra.mxu0 0
    %1110 = vmatprep.subr.bf16.mxu0 0
    %1111 = vmatpush1.bf16.msra.mxu0 0
    %1112 = vmatprep.subr.bf16.mxu0 0
    %1113 = vmatpush1.bf16.msra.mxu0 0
    %1114 = vmatprep.mubr.bf16.mxu0 0
    %1115 = vmatmul.mubr.bf16.gmra.mrb[0].mxu0 %v994
    %v1116 = vpop.f32.mrb[0].mxu0
    %v1117 = vadd.f32 %v905, %v1116
    %v1118 = vpop.f32.mrb[0].mxu0
    %v1119 = vadd.f32 %v909, %v1118
    %v1120 = vpop.f32.mrb[0].mxu0
    %v1121 = vadd.f32 %v905, %v1120
    %v1122 = vpop.f32.mrb[0].mxu0
    %v1123 = vadd.f32 %v909, %v1122
    %1124 = vdwg.mxu0
    %1125 = vmatprep.subr.bf16.mxu0 0
    %1126 = vmatpush1.bf16.msra.mxu0 %v971
    %1127 = vmatprep.subr.bf16.mxu0 0
    %1128 = vmatpush1.bf16.msra.mxu0 %v978
    %1129 = vmatprep.subr.bf16.mxu0 0
    %1130 = vmatpush1.bf16.msra.mxu0 0
    %1131 = vmatprep.subr.bf16.mxu0 0
    %1132 = vmatpush1.bf16.msra.mxu0 0
    %1133 = vmatprep.subr.bf16.mxu0 0
    %1134 = vmatpush1.bf16.msra.mxu0 0
    %1135 = vmatprep.subr.bf16.mxu0 0
    %1136 = vmatpush1.bf16.msra.mxu0 0
    %1137 = vmatprep.subr.bf16.mxu0 0
    %1138 = vmatpush1.bf16.msra.mxu0 0
    %1139 = vmatprep.subr.bf16.mxu0 0
    %1140 = vmatpush1.bf16.msra.mxu0 0
    %1141 = vmatprep.subr.bf16.mxu0 0
    %1142 = vmatpush1.bf16.msra.mxu0 0
    %1143 = vmatprep.subr.bf16.mxu0 0
    %1144 = vmatpush1.bf16.msra.mxu0 0
    %1145 = vmatprep.subr.bf16.mxu0 0
    %1146 = vmatpush1.bf16.msra.mxu0 0
    %1147 = vmatprep.subr.bf16.mxu0 0
    %1148 = vmatpush1.bf16.msra.mxu0 0
    %1149 = vmatprep.subr.bf16.mxu0 0
    %1150 = vmatpush1.bf16.msra.mxu0 0
    %1151 = vmatprep.subr.bf16.mxu0 0
    %1152 = vmatpush1.bf16.msra.mxu0 0
    %1153 = vmatprep.subr.bf16.mxu0 0
    %1154 = vmatpush1.bf16.msra.mxu0 0
    %1155 = vmatprep.subr.bf16.mxu0 0
    %1156 = vmatpush1.bf16.msra.mxu0 0
    %1157 = vmatprep.mubr.bf16.mxu0 0
    %1158 = vmatmul.mubr.bf16.gmra.mrb[0].mxu0 %v994
    %v1159 = vpop.f32.mrb[0].mxu0
    %v1160 = vadd.f32 %v913, %v1159
    %v1161 = vpop.f32.mrb[0].mxu0
    %v1162 = vpop.f32.mrb[0].mxu0
    %v1163 = vadd.f32 %v913, %v1162
    %v1164 = vpop.f32.mrb[0].mxu0
    %1165 = vdwg.mxu0
    %v1166 = vsub.f32 0.0, %v1031
    %v1167 = vsub.f32 0.0, %v1033
    %v1168 = vsub.f32 0.0, %v1074
    %v1169 = vsub.f32 0.0, %v1076
    %v1170 = vsub.f32 0.0, %v1117
    %v1171 = vsub.f32 0.0, %v1119
    %v1172 = vsub.f32 0.0, %v1160
    %v1173 = vsub.f32 0.0, %v1035
    %v1174 = vsub.f32 0.0, %v1037
    %v1175 = vsub.f32 0.0, %v1078
    %v1176 = vsub.f32 0.0, %v1080
    %v1177 = vsub.f32 0.0, %v1121
    %v1178 = vsub.f32 0.0, %v1123
    %v1179 = vsub.f32 0.0, %v1163
    %v1180 = vmul.f32 %v1166, 1.442695
    %v1181 = vpow.pop %v1180
    %v1182 = vmul.f32 %v1167, 1.442695
    %v1183 = vpow.pop %v1182
    %v1184 = vmul.f32 %v1168, 1.442695
    %v1185 = vpow.pop %v1184
    %v1186 = vmul.f32 %v1169, 1.442695
    %v1187 = vpow.pop %v1186
    %v1188 = vmul.f32 %v1170, 1.442695
    %v1189 = vpow.pop %v1188
    %v1190 = vmul.f32 %v1171, 1.442695
    %v1191 = vpow.pop %v1190
    %v1192 = vmul.f32 %v1172, 1.442695
    %v1193 = vpow.pop %v1192
    %v1194 = vmul.f32 %v1173, 1.442695
    %v1195 = vpow.pop %v1194
    %v1196 = vmul.f32 %v1174, 1.442695
    %v1197 = vpow.pop %v1196
    %v1198 = vmul.f32 %v1175, 1.442695
    %v1199 = vpow.pop %v1198
    %v1200 = vmul.f32 %v1176, 1.442695
    %v1201 = vpow.pop %v1200
    %v1202 = vmul.f32 %v1177, 1.442695
    %v1203 = vpow.pop %v1202
    %v1204 = vmul.f32 %v1178, 1.442695
    %v1205 = vpow.pop %v1204
    %v1206 = vmul.f32 %v1179, 1.442695
    %v1207 = vpow.pop %v1206
    %v1208 = vadd.f32 %v1181, 1.0
    %v1209 = vadd.f32 %v1183, 1.0
    %v1210 = vadd.f32 %v1185, 1.0
    %v1211 = vadd.f32 %v1187, 1.0
    %v1212 = vadd.f32 %v1189, 1.0
    %v1213 = vadd.f32 %v1191, 1.0
    %v1214 = vadd.f32 %v1193, 1.0
    %v1215 = vadd.f32 %v1195, 1.0
    %v1216 = vadd.f32 %v1197, 1.0
    %v1217 = vadd.f32 %v1199, 1.0
    %v1218 = vadd.f32 %v1201, 1.0
    %v1219 = vadd.f32 %v1203, 1.0
    %v1220 = vadd.f32 %v1205, 1.0
    %v1221 = vadd.f32 %v1207, 1.0
    %v1222 = vrcp.pop %v1208
    %v1223 = vrcp.pop %v1209
    %v1224 = vrcp.pop %v1210
    %v1225 = vrcp.pop %v1211
    %v1226 = vrcp.pop %v1212
    %v1227 = vrcp.pop %v1213
    %v1228 = vrcp.pop %v1214
    %v1229 = vrcp.pop %v1215
    %v1230 = vrcp.pop %v1216
    %v1231 = vrcp.pop %v1217
    %v1232 = vrcp.pop %v1218
    %v1233 = vrcp.pop %v1219
    %v1234 = vrcp.pop %v1220
    %v1235 = vrcp.pop %v1221
    %1236 = vst [vmem:[#allocation2] sm:$0xff] %v1222
    %1237 = vst [vmem:[#allocation2 + $0x8] sm:$0xff] %v1223
    %1238 = vst [vmem:[#allocation2 + $0x10] sm:$0xff] %v1224
    %1239 = vst [vmem:[#allocation2 + $0x18] sm:$0xff] %v1225
    %1240 = vst [vmem:[#allocation2 + $0x20] sm:$0xff] %v1226
    %1241 = vst [vmem:[#allocation2 + $0x28] sm:$0xff] %v1227
    %1242 = vst [vmem:[#allocation2 + $0x30] sm:$0xff] %v1228
    %1243 = vst [vmem:[#allocation2 + $0x38] sm:$0xff] %v1229
    %1244 = vst [vmem:[#allocation2 + $0x40] sm:$0xff] %v1230
    %1245 = vst [vmem:[#allocation2 + $0x48] sm:$0xff] %v1231
    %1246 = vst [vmem:[#allocation2 + $0x50] sm:$0xff] %v1232
    %1247 = vst [vmem:[#allocation2 + $0x58] sm:$0xff] %v1233
    %1248 = vst [vmem:[#allocation2 + $0x60] sm:$0xff] %v1234
    %1249 = vst [vmem:[#allocation2 + $0x68] sm:$0xff] %v1235
    // Predicated region
    $region42: #{tpu_custom_call.1} parent=1 // pred_check
      _
    $region43: #{tpu_custom_call.1} parent=1 // pred_check_branch
      %1251 = sbr.rel (0) target = $region45
    $region44: #{tpu_custom_call.1} parent=1 // pred_region
      %s1253 = ssub.s32 1792, 1792
      %1254 = vsyncadd [#allocation3], %s1253
      %s1255 = sshll.u32 [#allocation2], 4
      %s1256 = int_to_ptr.vmem [resolvable:$true] %s1255
      %1261 = dma.vmem_to_hbm [thread:$0]  %s1256, 1792, %s10, [#allocation3], 896, 896, 56
    $region45: #{tpu_custom_call.1} parent=1 // pred_fallthru
      _
    // Predicated region
    $region46: #{tpu_custom_call.1} parent=1 // pred_check
      _
    $region47: #{tpu_custom_call.1} parent=1 // pred_check_branch
      %1263 = sbr.rel (0) target = $region49
    $region48: #{tpu_custom_call.1} parent=1 // pred_region
      %s1265 = ssub.s32 256, 256
      %1266 = vsyncadd [#allocation5], %s1265
      %s1267 = sshll.u32 [#allocation4], 4
      %s1268 = int_to_ptr.vmem [resolvable:$true] %s1267
      %1273 = dma.vmem_to_hbm [thread:$0]  %s1268, 256, %s11, [#allocation5], 128, 128, 8
    $region49: #{tpu_custom_call.1} parent=1 // pred_fallthru
      _
    // Predicated region
    $region50: #{tpu_custom_call.1} parent=1 // pred_check
      _
    $region51: #{tpu_custom_call.1} parent=1 // pred_check_branch
      %1275 = sbr.rel (0) target = $region53
    $region52: #{tpu_custom_call.1} parent=1 // pred_region
      %1276 = dma.done [#allocation3], 1792
    $region53: #{tpu_custom_call.1} parent=1 // pred_fallthru
      _
    // Predicated region
    $region54: #{tpu_custom_call.1} parent=1 // pred_check
      _
    $region55: #{tpu_custom_call.1} parent=1 // pred_check_branch
      %1278 = sbr.rel (0) target = $region57
    $region56: #{tpu_custom_call.1} parent=1 // pred_region
      %1279 = dma.done [#allocation5], 256
    $region57: #{tpu_custom_call.1} parent=1 // pred_fallthru
      _
    %1280 = vsyncpa [#allocation3], 1
    %1281 = vsyncpa [#allocation5], 1

</llo_original>
